<compile_context>
chip_gen: v5e
topology: v5e:2x2
jax: 0.10.0
libtpu: 0.0.40
codegen_flags: <defaults>
</compile_context>

<pallas_src>
import jax
import jax.numpy as jnp
from jax.experimental import pallas as pl
from jax.experimental.pallas import tpu as pltpu


def _abstract_reasoning_kernel(state_ref, ctx_ref, wx_ref, whh_ref, pew2_ref,
                               ffw1_ref, ffw2_ref, bias_ref, out_ref):
    H = state_ref.shape[-1]
    Hh = H // 2

    x = state_ref[...]                          # (TB, H) f32
    xb = x.astype(jnp.bfloat16)
    cb = ctx_ref[...].astype(jnp.bfloat16)

    b = bias_ref[...]                           # (13, H) f32 packed slab
    pe_b1 = b[0:1, :]
    pe_b2 = b[1:2, :Hh]
    ca_b1 = b[2:3, :]
    ca_b2 = b[3:4, :]
    bv = b[4:5, :]
    bo = b[5:6, :]
    ff_b1 = jnp.concatenate([b[6:7, :], b[7:8, :]], axis=-1)    # (1, 2H)
    ff_b2 = b[8:9, :]
    ln1_w, ln1_b = b[9:10, :], b[10:11, :]
    ln2_w, ln2_b = b[11:12, :], b[12:13, :]

    # --- one wide MXU dot for every projection consuming `state` ---
    xp = jnp.dot(xb, wx_ref[...], preferred_element_type=jnp.float32)  # (TB, 3H)

    # --- pattern_extractor: Linear -> ReLU -> Linear(H, H//2) ---
    h = jnp.maximum(xp[:, :H] + pe_b1, 0.0)
    patterns = jnp.dot(h.astype(jnp.bfloat16), pew2_ref[...],
                       preferred_element_type=jnp.float32) + pe_b2

    # --- causal_analyzer on concat([state, context]) (split-weight form) ---
    ca_pre = (xp[:, H:2 * H]
              + jnp.dot(cb, whh_ref[0], preferred_element_type=jnp.float32)
              + ca_b1)
    h2 = jnp.maximum(ca_pre, 0.0)
    causal = jnp.dot(h2.astype(jnp.bfloat16), whh_ref[1],
                     preferred_element_type=jnp.float32) + ca_b2

    # --- symbolic_reasoner: TransformerEncoderLayer with seq_len == 1 ---
    # self-attention over a single token: attn_out = out_proj(V(x))
    v = xp[:, 2 * H:] + bv
    attn = jnp.dot(v.astype(jnp.bfloat16), whh_ref[2],
                   preferred_element_type=jnp.float32) + bo
    y = x + attn
    mu = jnp.mean(y, axis=-1, keepdims=True)
    var = jnp.mean(y * y, axis=-1, keepdims=True) - mu * mu
    y = (y - mu) * jax.lax.rsqrt(var + 1e-5) * ln1_w + ln1_b

    ff = jnp.maximum(jnp.dot(y.astype(jnp.bfloat16), ffw1_ref[...],
                             preferred_element_type=jnp.float32) + ff_b1, 0.0)
    ff = jnp.dot(ff.astype(jnp.bfloat16), ffw2_ref[...],
                 preferred_element_type=jnp.float32) + ff_b2
    z = y + ff
    mu2 = jnp.mean(z, axis=-1, keepdims=True)
    var2 = jnp.mean(z * z, axis=-1, keepdims=True) - mu2 * mu2
    symbolic = (z - mu2) * jax.lax.rsqrt(var2 + 1e-5) * ln2_w + ln2_b

    # --- single fused output slab: [patterns | causal | symbolic] ---
    out_ref[:, :Hh] = patterns
    out_ref[:, Hh:Hh + H] = causal
    out_ref[:, Hh + H:] = symbolic


def _pick_batch_tile(B, target=256):
    if B <= target:
        return B
    for tb in range(target, 7, -8):
        if B % tb == 0:
            return tb
    return B


def abstract_reasoning_forward(state, context, packed, block_batch=None):
    B, H = state.shape
    Hh = H // 2
    out_w = Hh + 2 * H

    tb = block_batch if block_batch is not None else _pick_batch_tile(B)
    grid = (pl.cdiv(B, tb),)

    wx, whh = packed["wx"], packed["whh"]
    pe_w2, ff_w1, ff_w2 = packed["pe_w2"], packed["ff_w1"], packed["ff_w2"]
    bias = packed["bias"]

    def row_spec(width):
        return pl.BlockSpec((tb, width), lambda i: (i, 0))

    def full2(a):
        return pl.BlockSpec(a.shape, lambda i: (0, 0))

    def full3(a):
        return pl.BlockSpec(a.shape, lambda i: (0, 0, 0))

    weight_bytes = sum(int(a.size) * a.dtype.itemsize
                       for a in (wx, whh, pe_w2, ff_w1, ff_w2, bias))
    cost = pl.CostEstimate(
        flops=int(21 * B * H * H),                 # 2 * 10.5*H^2 MACs per row
        transcendentals=2 * B,                     # two rsqrt per row
        bytes_accessed=int(weight_bytes + 2 * B * H * 4 + B * out_w * 4),
    )

    fused = pl.pallas_call(
        _abstract_reasoning_kernel,
        out_shape=jax.ShapeDtypeStruct((B, out_w), jnp.float32),
        grid_spec=pltpu.PrefetchScalarGridSpec(
            num_scalar_prefetch=0,
            grid=grid,
            in_specs=[
                row_spec(H),              # state
                row_spec(H),              # context
                full2(wx),                # fused (H, 3H) x-projection, bf16
                full3(whh),               # stacked (3, H, H) weights, bf16
                full2(pe_w2),             # (H, H//2), bf16
                full2(ff_w1),             # (H, 2H), bf16
                full2(ff_w2),             # (2H, H), bf16
                full2(bias),              # packed (13, H) biases/LN params, f32
            ],
            out_specs=row_spec(out_w),
        ),
        compiler_params=pltpu.CompilerParams(
            dimension_semantics=("parallel",),
            vmem_limit_bytes=32 * 1024 * 1024,
        ),
        cost_estimate=cost,
    )(state, context, wx, whh, pe_w2, ff_w1, ff_w2, bias)

    return {
        "patterns": fused[:, :Hh],
        "causal_relations": fused[:, Hh:Hh + H],
        "symbolic_output": fused[:, Hh + H:],
        "pattern_memory": packed["pattern_memory"],
    }


def init_params(key, H):
    keys = jax.random.split(key, 8)

    def lin(k, din, dout):
        kw, kb = jax.random.split(k)
        bound = 1.0 / jnp.sqrt(jnp.float32(din))
        w = jax.random.uniform(kw, (din, dout), jnp.float32, -bound, bound)
        b = jax.random.uniform(kb, (1, dout), jnp.float32, -bound, bound)
        return w, b

    p = {}
    p["pe_w1"], p["pe_b1"] = lin(keys[0], H, H)
    p["pe_w2"], p["pe_b2"] = lin(keys[1], H, H // 2)
    ca_w1, p["ca_b1"] = lin(keys[2], 2 * H, H)
    p["ca_w1s"], p["ca_w1c"] = ca_w1[:H], ca_w1[H:]          # state / context halves
    p["ca_w2"], p["ca_b2"] = lin(keys[3], H, H)
    p["wv"], p["bv"] = lin(keys[4], H, H)                    # V slice of in_proj
    p["wo"], p["bo"] = lin(keys[5], H, H)                    # attn out_proj
    p["ff_w1"], p["ff_b1"] = lin(keys[6], H, 2 * H)
    p["ff_w2"], p["ff_b2"] = lin(keys[7], 2 * H, H)
    p["ln1_w"] = jnp.ones((1, H), jnp.float32)
    p["ln1_b"] = jnp.zeros((1, H), jnp.float32)
    p["ln2_w"] = jnp.ones((1, H), jnp.float32)
    p["ln2_b"] = jnp.zeros((1, H), jnp.float32)
    p["pattern_memory"] = jnp.zeros((100, H), jnp.float32)
    p["pattern_importance"] = jnp.zeros((100,), jnp.float32)
    return p


def pack_params(p):
    """One-time repacking of f32 module params into kernel-friendly arrays."""
    H = p["pe_w1"].shape[0]
    wx = jnp.concatenate([p["pe_w1"], p["ca_w1s"], p["wv"]],
                         axis=1).astype(jnp.bfloat16)                      # (H, 3H)
    whh = jnp.stack([p["ca_w1c"], p["ca_w2"], p["wo"]],
                    axis=0).astype(jnp.bfloat16)                           # (3, H, H)
    pad = jnp.zeros((1, H - H // 2), jnp.float32)
    bias = jnp.concatenate([
        p["pe_b1"],
        jnp.concatenate([p["pe_b2"], pad], axis=1),
        p["ca_b1"], p["ca_b2"], p["bv"], p["bo"],
        p["ff_b1"][:, :H], p["ff_b1"][:, H:],
        p["ff_b2"],
        p["ln1_w"], p["ln1_b"], p["ln2_w"], p["ln2_b"],
    ], axis=0).astype(jnp.float32)                                         # (13, H)
    return {
        "wx": wx,
        "whh": whh,
        "pe_w2": p["pe_w2"].astype(jnp.bfloat16),
        "ff_w1": p["ff_w1"].astype(jnp.bfloat16),
        "ff_w2": p["ff_w2"].astype(jnp.bfloat16),
        "bias": bias,
        "pattern_memory": p["pattern_memory"],
    }


def reference_forward(state, context, p):
    """Pure-JAX f32 reference for correctness checking."""
    h = jnp.maximum(state @ p["pe_w1"] + p["pe_b1"], 0.0)
    patterns = h @ p["pe_w2"] + p["pe_b2"]

    h2 = jnp.maximum(state @ p["ca_w1s"] + context @ p["ca_w1c"] + p["ca_b1"], 0.0)
    causal = h2 @ p["ca_w2"] + p["ca_b2"]

    v = state @ p["wv"] + p["bv"]
    attn = v @ p["wo"] + p["bo"]
    y = state + attn
    mu = jnp.mean(y, axis=-1, keepdims=True)
    var = jnp.mean((y - mu) ** 2, axis=-1, keepdims=True)
    y = (y - mu) / jnp.sqrt(var + 1e-5) * p["ln1_w"] + p["ln1_b"]
    ff = jnp.maximum(y @ p["ff_w1"] + p["ff_b1"], 0.0) @ p["ff_w2"] + p["ff_b2"]
    z = y + ff
    mu2 = jnp.mean(z, axis=-1, keepdims=True)
    var2 = jnp.mean((z - mu2) ** 2, axis=-1, keepdims=True)
    symbolic = (z - mu2) / jnp.sqrt(var2 + 1e-5) * p["ln2_w"] + p["ln2_b"]
    return {"patterns": patterns, "causal_relations": causal,
            "symbolic_output": symbolic, "pattern_memory": p["pattern_memory"]}


if __name__ == "__main__":
    H = 32    # hidden_dim
    B = 64    # batch of state/context rows
    key = jax.random.PRNGKey(0)
    k_state, k_ctx, k_params = jax.random.split(key, 3)
    state = jax.random.normal(k_state, (B, H), jnp.float32)
    context = jax.random.normal(k_ctx, (B, H), jnp.float32)
    params = init_params(k_params, H)
    packed = pack_params(params)

    # block_batch=16 -> grid=(4,): exercises the pipelined batch grid.
    out = abstract_reasoning_forward(state, context, packed, block_batch=16)
    out = jax.tree_util.tree_map(jax.block_until_ready, out)

    ref = reference_forward(state, context, params)
    # bf16 weights / bf16 matmul inputs with f32 accumulation -> loose tolerance.
    for name in ("patterns", "causal_relations", "symbolic_output"):
        assert out[name].shape == ref[name].shape, name
        err = float(jnp.max(jnp.abs(out[name] - ref[name])))
        assert jnp.allclose(out[name], ref[name], atol=5e-2, rtol=5e-2), (name, err)
    assert out["pattern_memory"].shape == (100, H)

    print("KERNEL_OK")
</pallas_src>

<mosaic_0001>
module attributes {stable_mosaic.version = 11 : i64} {
  func.func @_abstract_reasoning_kernel(%arg0: i32, %arg1: memref<16x32xf32, #tpu.memory_space<vmem>>, %arg2: memref<16x32xf32, #tpu.memory_space<vmem>>, %arg3: memref<32x96xbf16, #tpu.memory_space<vmem>>, %arg4: memref<3x32x32xbf16, #tpu.memory_space<vmem>>, %arg5: memref<32x16xbf16, #tpu.memory_space<vmem>>, %arg6: memref<32x64xbf16, #tpu.memory_space<vmem>>, %arg7: memref<64x32xbf16, #tpu.memory_space<vmem>>, %arg8: memref<13x32xf32, #tpu.memory_space<vmem>>, %arg9: memref<16x80xf32, #tpu.memory_space<vmem>>) attributes {dimension_semantics = [#tpu.dimension_semantics<parallel>], iteration_bounds = array<i64: 4>, scalar_prefetch = 0 : i64, scratch_operands = 0 : i64, tpu.core_type = #tpu.core_type<tc>, window_params = [{transform_indices = @transform_0, window_bounds = array<i64: 16, 32>}, {transform_indices = @transform_1, window_bounds = array<i64: 16, 32>}, {pipeline_mode = #tpu.pipeline_mode<synchronous>, transform_indices = @transform_2, window_bounds = array<i64: 32, 96>}, {pipeline_mode = #tpu.pipeline_mode<synchronous>, transform_indices = @transform_3, window_bounds = array<i64: 3, 32, 32>}, {pipeline_mode = #tpu.pipeline_mode<synchronous>, transform_indices = @transform_4, window_bounds = array<i64: 32, 16>}, {pipeline_mode = #tpu.pipeline_mode<synchronous>, transform_indices = @transform_5, window_bounds = array<i64: 32, 64>}, {pipeline_mode = #tpu.pipeline_mode<synchronous>, transform_indices = @transform_6, window_bounds = array<i64: 64, 32>}, {pipeline_mode = #tpu.pipeline_mode<synchronous>, transform_indices = @transform_7, window_bounds = array<i64: 13, 32>}, {transform_indices = @transform_8, window_bounds = array<i64: 16, 80>}]} {
    %c0 = arith.constant 0 : index
    %c0_0 = arith.constant 0 : index
    %0 = vector.load %arg1[%c0, %c0_0] : memref<16x32xf32, #tpu.memory_space<vmem>>, vector<16x32xf32>
    %1 = arith.truncf %0 : vector<16x32xf32> to vector<16x32xbf16>
    %c0_1 = arith.constant 0 : index
    %c0_2 = arith.constant 0 : index
    %2 = vector.load %arg2[%c0_1, %c0_2] : memref<16x32xf32, #tpu.memory_space<vmem>>, vector<16x32xf32>
    %3 = arith.truncf %2 : vector<16x32xf32> to vector<16x32xbf16>
    %c0_3 = arith.constant 0 : index
    %c0_4 = arith.constant 0 : index
    %4 = vector.load %arg8[%c0_3, %c0_4] : memref<13x32xf32, #tpu.memory_space<vmem>>, vector<13x32xf32>
    %5 = vector.extract_strided_slice %4 {offsets = [0, 0], sizes = [1, 32], strides = [1, 1]} : vector<13x32xf32> to vector<1x32xf32>
    %6 = vector.extract_strided_slice %4 {offsets = [1, 0], sizes = [1, 16], strides = [1, 1]} : vector<13x32xf32> to vector<1x16xf32>
    %7 = vector.extract_strided_slice %4 {offsets = [2, 0], sizes = [1, 32], strides = [1, 1]} : vector<13x32xf32> to vector<1x32xf32>
    %8 = vector.extract_strided_slice %4 {offsets = [3, 0], sizes = [1, 32], strides = [1, 1]} : vector<13x32xf32> to vector<1x32xf32>
    %9 = vector.extract_strided_slice %4 {offsets = [4, 0], sizes = [1, 32], strides = [1, 1]} : vector<13x32xf32> to vector<1x32xf32>
    %10 = vector.extract_strided_slice %4 {offsets = [5, 0], sizes = [1, 32], strides = [1, 1]} : vector<13x32xf32> to vector<1x32xf32>
    %11 = vector.extract_strided_slice %4 {offsets = [6, 0], sizes = [1, 32], strides = [1, 1]} : vector<13x32xf32> to vector<1x32xf32>
    %12 = vector.extract_strided_slice %4 {offsets = [7, 0], sizes = [1, 32], strides = [1, 1]} : vector<13x32xf32> to vector<1x32xf32>
    %13 = tpu.concatenate %11, %12 in 1 : vector<1x32xf32>, vector<1x32xf32> -> vector<1x64xf32>
    %14 = vector.extract_strided_slice %4 {offsets = [8, 0], sizes = [1, 32], strides = [1, 1]} : vector<13x32xf32> to vector<1x32xf32>
    %15 = vector.extract_strided_slice %4 {offsets = [9, 0], sizes = [1, 32], strides = [1, 1]} : vector<13x32xf32> to vector<1x32xf32>
    %16 = vector.extract_strided_slice %4 {offsets = [10, 0], sizes = [1, 32], strides = [1, 1]} : vector<13x32xf32> to vector<1x32xf32>
    %17 = vector.extract_strided_slice %4 {offsets = [11, 0], sizes = [1, 32], strides = [1, 1]} : vector<13x32xf32> to vector<1x32xf32>
    %18 = vector.extract_strided_slice %4 {offsets = [12, 0], sizes = [1, 32], strides = [1, 1]} : vector<13x32xf32> to vector<1x32xf32>
    %c0_5 = arith.constant 0 : index
    %c0_6 = arith.constant 0 : index
    %19 = vector.load %arg3[%c0_5, %c0_6] : memref<32x96xbf16, #tpu.memory_space<vmem>>, vector<32x96xbf16>
    %cst = arith.constant dense<0.000000e+00> : vector<16x96xf32>
    %20 = tpu.matmul %1, %19, %cst {dimension_numbers = #tpu.dot_dimension_numbers<[1], [0], [0], [1], [0, 0, 1, 1], [], []>} : vector<16x32xbf16>, vector<32x96xbf16>, vector<16x96xf32> -> vector<16x96xf32>
    %21 = vector.extract_strided_slice %20 {offsets = [0, 0], sizes = [16, 32], strides = [1, 1]} : vector<16x96xf32> to vector<16x32xf32>
    %22 = vector.broadcast %5 : vector<1x32xf32> to vector<16x32xf32>
    %23 = arith.addf %21, %22 : vector<16x32xf32>
    %cst_7 = arith.constant 0.000000e+00 : f32
    %24 = vector.broadcast %cst_7 : f32 to vector<16x32xf32>
    %25 = arith.maximumf %23, %24 : vector<16x32xf32>
    %26 = arith.truncf %25 : vector<16x32xf32> to vector<16x32xbf16>
    %c0_8 = arith.constant 0 : index
    %c0_9 = arith.constant 0 : index
    %27 = vector.load %arg5[%c0_8, %c0_9] : memref<32x16xbf16, #tpu.memory_space<vmem>>, vector<32x16xbf16>
    %cst_10 = arith.constant dense<0.000000e+00> : vector<16x16xf32>
    %28 = tpu.matmul %26, %27, %cst_10 {dimension_numbers = #tpu.dot_dimension_numbers<[1], [0], [0], [1], [0, 0, 1, 1], [], []>} : vector<16x32xbf16>, vector<32x16xbf16>, vector<16x16xf32> -> vector<16x16xf32>
    %29 = vector.broadcast %6 : vector<1x16xf32> to vector<16x16xf32>
    %30 = arith.addf %28, %29 : vector<16x16xf32>
    %31 = vector.extract_strided_slice %20 {offsets = [0, 32], sizes = [16, 32], strides = [1, 1]} : vector<16x96xf32> to vector<16x32xf32>
    %c0_11 = arith.constant 0 : index
    %c0_12 = arith.constant 0 : index
    %c0_13 = arith.constant 0 : index
    %32 = vector.load %arg4[%c0_11, %c0_12, %c0_13] : memref<3x32x32xbf16, #tpu.memory_space<vmem>>, vector<1x32x32xbf16>
    %33 = vector.shape_cast %32 : vector<1x32x32xbf16> to vector<32x32xbf16>
    %cst_14 = arith.constant dense<0.000000e+00> : vector<16x32xf32>
    %34 = tpu.matmul %3, %33, %cst_14 {dimension_numbers = #tpu.dot_dimension_numbers<[1], [0], [0], [1], [0, 0, 1, 1], [], []>} : vector<16x32xbf16>, vector<32x32xbf16>, vector<16x32xf32> -> vector<16x32xf32>
    %35 = arith.addf %31, %34 : vector<16x32xf32>
    %36 = vector.broadcast %7 : vector<1x32xf32> to vector<16x32xf32>
    %37 = arith.addf %35, %36 : vector<16x32xf32>
    %cst_15 = arith.constant 0.000000e+00 : f32
    %38 = vector.broadcast %cst_15 : f32 to vector<16x32xf32>
    %39 = arith.maximumf %37, %38 : vector<16x32xf32>
    %40 = arith.truncf %39 : vector<16x32xf32> to vector<16x32xbf16>
    %c1 = arith.constant 1 : index
    %c0_16 = arith.constant 0 : index
    %c0_17 = arith.constant 0 : index
    %41 = vector.load %arg4[%c1, %c0_16, %c0_17] : memref<3x32x32xbf16, #tpu.memory_space<vmem>>, vector<1x32x32xbf16>
    %42 = vector.shape_cast %41 : vector<1x32x32xbf16> to vector<32x32xbf16>
    %cst_18 = arith.constant dense<0.000000e+00> : vector<16x32xf32>
    %43 = tpu.matmul %40, %42, %cst_18 {dimension_numbers = #tpu.dot_dimension_numbers<[1], [0], [0], [1], [0, 0, 1, 1], [], []>} : vector<16x32xbf16>, vector<32x32xbf16>, vector<16x32xf32> -> vector<16x32xf32>
    %44 = vector.broadcast %8 : vector<1x32xf32> to vector<16x32xf32>
    %45 = arith.addf %43, %44 : vector<16x32xf32>
    %46 = vector.extract_strided_slice %20 {offsets = [0, 64], sizes = [16, 32], strides = [1, 1]} : vector<16x96xf32> to vector<16x32xf32>
    %47 = vector.broadcast %9 : vector<1x32xf32> to vector<16x32xf32>
    %48 = arith.addf %46, %47 : vector<16x32xf32>
    %49 = arith.truncf %48 : vector<16x32xf32> to vector<16x32xbf16>
    %c2 = arith.constant 2 : index
    %c0_19 = arith.constant 0 : index
    %c0_20 = arith.constant 0 : index
    %50 = vector.load %arg4[%c2, %c0_19, %c0_20] : memref<3x32x32xbf16, #tpu.memory_space<vmem>>, vector<1x32x32xbf16>
    %51 = vector.shape_cast %50 : vector<1x32x32xbf16> to vector<32x32xbf16>
    %cst_21 = arith.constant dense<0.000000e+00> : vector<16x32xf32>
    %52 = tpu.matmul %49, %51, %cst_21 {dimension_numbers = #tpu.dot_dimension_numbers<[1], [0], [0], [1], [0, 0, 1, 1], [], []>} : vector<16x32xbf16>, vector<32x32xbf16>, vector<16x32xf32> -> vector<16x32xf32>
    %53 = vector.broadcast %10 : vector<1x32xf32> to vector<16x32xf32>
    %54 = arith.addf %52, %53 : vector<16x32xf32>
    %55 = arith.addf %0, %54 : vector<16x32xf32>
    %cst_22 = arith.constant dense<0.000000e+00> : vector<16xf32>
    %56 = vector.multi_reduction <add>, %55, %cst_22 [1] : vector<16x32xf32> to vector<16xf32>
    %57 = vector.shape_cast %56 : vector<16xf32> to vector<16x1xf32>
    %cst_23 = arith.constant 3.200000e+01 : f32
    %58 = vector.broadcast %cst_23 : f32 to vector<16x1xf32>
    %59 = arith.divf %57, %58 : vector<16x1xf32>
    %60 = arith.mulf %55, %55 : vector<16x32xf32>
    %cst_24 = arith.constant dense<0.000000e+00> : vector<16xf32>
    %61 = vector.multi_reduction <add>, %60, %cst_24 [1] : vector<16x32xf32> to vector<16xf32>
    %62 = vector.shape_cast %61 : vector<16xf32> to vector<16x1xf32>
    %cst_25 = arith.constant 3.200000e+01 : f32
    %63 = vector.broadcast %cst_25 : f32 to vector<16x1xf32>
    %64 = arith.divf %62, %63 : vector<16x1xf32>
    %65 = arith.mulf %59, %59 : vector<16x1xf32>
    %66 = arith.subf %64, %65 : vector<16x1xf32>
    %67 = vector.broadcast %59 : vector<16x1xf32> to vector<16x32xf32>
    %68 = arith.subf %55, %67 : vector<16x32xf32>
    %cst_26 = arith.constant 9.99999974E-6 : f32
    %69 = vector.broadcast %cst_26 : f32 to vector<16x1xf32>
    %70 = arith.addf %66, %69 : vector<16x1xf32>
    %71 = math.rsqrt %70 : vector<16x1xf32>
    %72 = vector.broadcast %71 : vector<16x1xf32> to vector<16x32xf32>
    %73 = arith.mulf %68, %72 : vector<16x32xf32>
    %74 = vector.broadcast %15 : vector<1x32xf32> to vector<16x32xf32>
    %75 = arith.mulf %73, %74 : vector<16x32xf32>
    %76 = vector.broadcast %16 : vector<1x32xf32> to vector<16x32xf32>
    %77 = arith.addf %75, %76 : vector<16x32xf32>
    %78 = arith.truncf %77 : vector<16x32xf32> to vector<16x32xbf16>
    %c0_27 = arith.constant 0 : index
    %c0_28 = arith.constant 0 : index
    %79 = vector.load %arg6[%c0_27, %c0_28] : memref<32x64xbf16, #tpu.memory_space<vmem>>, vector<32x64xbf16>
    %cst_29 = arith.constant dense<0.000000e+00> : vector<16x64xf32>
    %80 = tpu.matmul %78, %79, %cst_29 {dimension_numbers = #tpu.dot_dimension_numbers<[1], [0], [0], [1], [0, 0, 1, 1], [], []>} : vector<16x32xbf16>, vector<32x64xbf16>, vector<16x64xf32> -> vector<16x64xf32>
    %81 = vector.broadcast %13 : vector<1x64xf32> to vector<16x64xf32>
    %82 = arith.addf %80, %81 : vector<16x64xf32>
    %cst_30 = arith.constant 0.000000e+00 : f32
    %83 = vector.broadcast %cst_30 : f32 to vector<16x64xf32>
    %84 = arith.maximumf %82, %83 : vector<16x64xf32>
    %85 = arith.truncf %84 : vector<16x64xf32> to vector<16x64xbf16>
    %c0_31 = arith.constant 0 : index
    %c0_32 = arith.constant 0 : index
    %86 = vector.load %arg7[%c0_31, %c0_32] : memref<64x32xbf16, #tpu.memory_space<vmem>>, vector<64x32xbf16>
    %cst_33 = arith.constant dense<0.000000e+00> : vector<16x32xf32>
    %87 = tpu.matmul %85, %86, %cst_33 {dimension_numbers = #tpu.dot_dimension_numbers<[1], [0], [0], [1], [0, 0, 1, 1], [], []>} : vector<16x64xbf16>, vector<64x32xbf16>, vector<16x32xf32> -> vector<16x32xf32>
    %88 = vector.broadcast %14 : vector<1x32xf32> to vector<16x32xf32>
    %89 = arith.addf %87, %88 : vector<16x32xf32>
    %90 = arith.addf %77, %89 : vector<16x32xf32>
    %cst_34 = arith.constant dense<0.000000e+00> : vector<16xf32>
    %91 = vector.multi_reduction <add>, %90, %cst_34 [1] : vector<16x32xf32> to vector<16xf32>
    %92 = vector.shape_cast %91 : vector<16xf32> to vector<16x1xf32>
    %cst_35 = arith.constant 3.200000e+01 : f32
    %93 = vector.broadcast %cst_35 : f32 to vector<16x1xf32>
    %94 = arith.divf %92, %93 : vector<16x1xf32>
    %95 = arith.mulf %90, %90 : vector<16x32xf32>
    %cst_36 = arith.constant dense<0.000000e+00> : vector<16xf32>
    %96 = vector.multi_reduction <add>, %95, %cst_36 [1] : vector<16x32xf32> to vector<16xf32>
    %97 = vector.shape_cast %96 : vector<16xf32> to vector<16x1xf32>
    %cst_37 = arith.constant 3.200000e+01 : f32
    %98 = vector.broadcast %cst_37 : f32 to vector<16x1xf32>
    %99 = arith.divf %97, %98 : vector<16x1xf32>
    %100 = arith.mulf %94, %94 : vector<16x1xf32>
    %101 = arith.subf %99, %100 : vector<16x1xf32>
    %102 = vector.broadcast %94 : vector<16x1xf32> to vector<16x32xf32>
    %103 = arith.subf %90, %102 : vector<16x32xf32>
    %cst_38 = arith.constant 9.99999974E-6 : f32
    %104 = vector.broadcast %cst_38 : f32 to vector<16x1xf32>
    %105 = arith.addf %101, %104 : vector<16x1xf32>
    %106 = math.rsqrt %105 : vector<16x1xf32>
    %107 = vector.broadcast %106 : vector<16x1xf32> to vector<16x32xf32>
    %108 = arith.mulf %103, %107 : vector<16x32xf32>
    %109 = vector.broadcast %17 : vector<1x32xf32> to vector<16x32xf32>
    %110 = arith.mulf %108, %109 : vector<16x32xf32>
    %111 = vector.broadcast %18 : vector<1x32xf32> to vector<16x32xf32>
    %112 = arith.addf %110, %111 : vector<16x32xf32>
    %c0_39 = arith.constant 0 : index
    %c0_40 = arith.constant 0 : index
    %113 = vector.load %arg9[%c0_39, %c0_40] : memref<16x80xf32, #tpu.memory_space<vmem>>, vector<16x16xf32>
    tpu.vector_store %arg9[%c0_39, %c0_40], %30 {strides = array<i32>} : memref<16x80xf32, #tpu.memory_space<vmem>>, vector<16x16xf32>,
    %c0_41 = arith.constant 0 : index
    %c16 = arith.constant 16 : index
    %114 = vector.load %arg9[%c0_41, %c16] : memref<16x80xf32, #tpu.memory_space<vmem>>, vector<16x32xf32>
    tpu.vector_store %arg9[%c0_41, %c16], %45 {strides = array<i32>} : memref<16x80xf32, #tpu.memory_space<vmem>>, vector<16x32xf32>,
    %c0_42 = arith.constant 0 : index
    %c48 = arith.constant 48 : index
    %115 = vector.load %arg9[%c0_42, %c48] : memref<16x80xf32, #tpu.memory_space<vmem>>, vector<16x32xf32>
    tpu.vector_store %arg9[%c0_42, %c48], %112 {strides = array<i32>} : memref<16x80xf32, #tpu.memory_space<vmem>>, vector<16x32xf32>,
    return
  }
  func.func @transform_0(%arg0: i32) -> (i32, i32) {
    %c0_i32 = arith.constant 0 : i32
    %c0_i32_0 = arith.constant 0 : i32
    return %arg0, %c0_i32 : i32, i32
  }
  func.func @transform_1(%arg0: i32) -> (i32, i32) {
    %c0_i32 = arith.constant 0 : i32
    %c0_i32_0 = arith.constant 0 : i32
    return %arg0, %c0_i32 : i32, i32
  }
  func.func @transform_2(%arg0: i32) -> (i32, i32) {
    %c0_i32 = arith.constant 0 : i32
    %c0_i32_0 = arith.constant 0 : i32
    %c0_i32_1 = arith.constant 0 : i32
    return %c0_i32, %c0_i32_0 : i32, i32
  }
  func.func @transform_3(%arg0: i32) -> (i32, i32, i32) {
    %c0_i32 = arith.constant 0 : i32
    %c0_i32_0 = arith.constant 0 : i32
    %c0_i32_1 = arith.constant 0 : i32
    %c0_i32_2 = arith.constant 0 : i32
    return %c0_i32, %c0_i32_0, %c0_i32_1 : i32, i32, i32
  }
  func.func @transform_4(%arg0: i32) -> (i32, i32) {
    %c0_i32 = arith.constant 0 : i32
    %c0_i32_0 = arith.constant 0 : i32
    %c0_i32_1 = arith.constant 0 : i32
    return %c0_i32, %c0_i32_0 : i32, i32
  }
  func.func @transform_5(%arg0: i32) -> (i32, i32) {
    %c0_i32 = arith.constant 0 : i32
    %c0_i32_0 = arith.constant 0 : i32
    %c0_i32_1 = arith.constant 0 : i32
    return %c0_i32, %c0_i32_0 : i32, i32
  }
  func.func @transform_6(%arg0: i32) -> (i32, i32) {
    %c0_i32 = arith.constant 0 : i32
    %c0_i32_0 = arith.constant 0 : i32
    %c0_i32_1 = arith.constant 0 : i32
    return %c0_i32, %c0_i32_0 : i32, i32
  }
  func.func @transform_7(%arg0: i32) -> (i32, i32) {
    %c0_i32 = arith.constant 0 : i32
    %c0_i32_0 = arith.constant 0 : i32
    %c0_i32_1 = arith.constant 0 : i32
    return %c0_i32, %c0_i32_0 : i32, i32
  }
  func.func @transform_8(%arg0: i32) -> (i32, i32) {
    %c0_i32 = arith.constant 0 : i32
    %c0_i32_0 = arith.constant 0 : i32
    return %arg0, %c0_i32 : i32, i32
  }
}

</mosaic_0001>

<llo_original>
// kernel: tpu_custom_call.1
$region0: #{tpu_custom_call.1}
  #allocation0 [shape = 'u32[]', space=smem, size = 0x4, offset = 0x4, fixed_abs, tag = 'smem constant byte address 0x4 - core index']
  #allocation1 [shape = 'u32[72,128]{1,0:T(1,128)}', space=vmem, size = 0x9000, scoped, tag = 'internal scratch']
  %s0 = inlined_call_operand.vmem [shape: f32[64,32], index: 0, kind: input, shape index: {}]
  %s1 = inlined_call_operand.vmem [shape: f32[64,32], index: 1, kind: input, shape index: {}]
  %s2 = inlined_call_operand.vmem [shape: bf16[32,96], index: 2, kind: input, shape index: {}]
  %s3 = inlined_call_operand.vmem [shape: bf16[3,32,32], index: 3, kind: input, shape index: {}]
  %s4 = inlined_call_operand.vmem [shape: bf16[32,16], index: 4, kind: input, shape index: {}]
  %s5 = inlined_call_operand.vmem [shape: bf16[32,64], index: 5, kind: input, shape index: {}]
  %s6 = inlined_call_operand.vmem [shape: bf16[64,32], index: 6, kind: input, shape index: {}]
  %s7 = inlined_call_operand.vmem [shape: f32[13,32], index: 7, kind: input, shape index: {}]
  %s8 = inlined_call_operand.hbm [shape: f32[64,80], index: 8, kind: output, shape index: {}]
  %s9 = sld [smem:[#allocation0]]
  $region65: #{tpu_custom_call.1} parent=0
    _
  %s11 = ssub.s32 1, %s9
  %s12 = scalar_select 0, %s11, %s9
  $region1: #{tpu_custom_call.1} parent=0
    #allocation2 [shape = 'u8[16384]{0}', space=vmem, size = 0x4000, scoped, tag = 'output window, operand 0']
    #allocation3 [shape = 's32[2]{0}', space=sflag, size = 0x8, scoped, tag = 'scoped memory for tpu_custom_call.1']
    %13 = vsyncpa [#allocation3], 0
    %s14 = scalar_lea.sflag [#allocation3], 1
    %15 = vsyncpa %s14, 0
    loop: start=0, step=1, limit=6
    $region2: #{tpu_custom_call.1} parent=1 // loop_pre_header
      _
    $region3: #{tpu_custom_call.1} parent=1 // loop_header
      %s17 = sphi 0, %s21
      %p18 = scmp.ge.s32.totalorder %s17, 6
      %s27 = sphi 0, %s29
      %s30 = sphi 0, %s27
      %s31 = sphi 0, %s30
      %s47 = sphi 0, %s31
      %s53 = sphi 0, %s55
      %s56 = sphi 0, %s53
      %s57 = sphi 0, %s56
      %s73 = sphi 0, %s57
      %s77 = sphi 0, %s77
      %s79 = sphi 0, %s77
      %s80 = sphi 0, %s79
      %s94 = sphi 0, %s80
      %s98 = sphi 0, %s98
      %s100 = sphi 0, %s98
      %s101 = sphi 0, %s100
      %s115 = sphi 0, %s101
      %s119 = sphi 0, %s119
      %s121 = sphi 0, %s119
      %s122 = sphi 0, %s121
      %s136 = sphi 0, %s122
      %s140 = sphi 0, %s140
      %s142 = sphi 0, %s140
      %s143 = sphi 0, %s142
      %s157 = sphi 0, %s143
      %s161 = sphi 0, %s161
      %s163 = sphi 0, %s161
      %s164 = sphi 0, %s163
      %s178 = sphi 0, %s164
      %s182 = sphi 0, %s182
      %s184 = sphi 0, %s182
      %s185 = sphi 0, %s184
      %s199 = sphi 0, %s185
      %s205 = sphi 0, %s207
      %s208 = sphi 0, %s205
      %s209 = sphi 0, %s208
      %s225 = sphi 0, %s209
    $region4: #{tpu_custom_call.1} parent=1 // loop_header_branch
      %20 = sbr.rel (%p18) target = $region8
    $region5: #{tpu_custom_call.1} parent=1 // loop_body
      %s22 = ssub.s32 %s17, 1
      %s23 = ssub.s32 %s17, 2
      %s24 = sadd.s32 %s17, 1
      %s25 = ssub.s32 %s17, %s24
      %p26 = scmp.eq.s32.totalorder %s25, 0
      %s28 = sadd.s32 %s27, 1
      %s29 = scalar_select %p26, %s27, %s28
      %p32 = pneg %p26
      %p33 = scmp.eq.s32.totalorder %s17, 3
      %p34 = por %p32, %p33
      %p35 = scmp.ne.s32.totalorder %s27, %s30
      %p36 = scmp.eq.s32.totalorder %s17, 0
      %p37 = por %p35, %p36
      %p38 = scmp.ne.s32.totalorder %s27, %s30
      %p39 = scmp.eq.s32.totalorder %s22, 3
      %p40 = por %p38, %p39
      %p41 = scmp.ne.s32.totalorder %s30, %s31
      %p42 = scmp.eq.s32.totalorder %s22, 0
      %p43 = por %p41, %p42
      %p44 = scmp.ne.s32.totalorder %s30, %s31
      %p45 = scmp.eq.s32.totalorder %s23, 3
      %p46 = por %p44, %p45
      %p48 = scmp.ne.s32.totalorder %s31, %s47
      %p49 = scmp.eq.s32.totalorder %s23, 0
      %p50 = por %p48, %p49
      %s51 = ssub.s32 %s17, %s24
      %p52 = scmp.eq.s32.totalorder %s51, 0
      %s54 = sadd.s32 %s53, 1
      %s55 = scalar_select %p52, %s53, %s54
      %p58 = pneg %p52
      %p59 = scmp.eq.s32.totalorder %s17, 3
      %p60 = por %p58, %p59
      %p61 = scmp.ne.s32.totalorder %s53, %s56
      %p62 = scmp.eq.s32.totalorder %s17, 0
      %p63 = por %p61, %p62
      %p64 = scmp.ne.s32.totalorder %s53, %s56
      %p65 = scmp.eq.s32.totalorder %s22, 3
      %p66 = por %p64, %p65
      %p67 = scmp.ne.s32.totalorder %s56, %s57
      %p68 = scmp.eq.s32.totalorder %s22, 0
      %p69 = por %p67, %p68
      %p70 = scmp.ne.s32.totalorder %s56, %s57
      %p71 = scmp.eq.s32.totalorder %s23, 3
      %p72 = por %p70, %p71
      %p74 = scmp.ne.s32.totalorder %s57, %s73
      %p75 = scmp.eq.s32.totalorder %s23, 0
      %p76 = por %p74, %p75
      %s78 = sadd.s32 %s77, 1
      %p81 = scmp.eq.s32.totalorder %s17, 3
      %p82 = scmp.ne.s32.totalorder %s77, %s79
      %p83 = scmp.eq.s32.totalorder %s17, 0
      %p84 = por %p82, %p83
      %p85 = scmp.ne.s32.totalorder %s77, %s79
      %p86 = scmp.eq.s32.totalorder %s22, 3
      %p87 = por %p85, %p86
      %p88 = scmp.ne.s32.totalorder %s79, %s80
      %p89 = scmp.eq.s32.totalorder %s22, 0
      %p90 = por %p88, %p89
      %p91 = scmp.ne.s32.totalorder %s79, %s80
      %p92 = scmp.eq.s32.totalorder %s23, 3
      %p93 = por %p91, %p92
      %p95 = scmp.ne.s32.totalorder %s80, %s94
      %p96 = scmp.eq.s32.totalorder %s23, 0
      %p97 = por %p95, %p96
      %s99 = sadd.s32 %s98, 1
      %p102 = scmp.eq.s32.totalorder %s17, 3
      %p103 = scmp.ne.s32.totalorder %s98, %s100
      %p104 = scmp.eq.s32.totalorder %s17, 0
      %p105 = por %p103, %p104
      %p106 = scmp.ne.s32.totalorder %s98, %s100
      %p107 = scmp.eq.s32.totalorder %s22, 3
      %p108 = por %p106, %p107
      %p109 = scmp.ne.s32.totalorder %s100, %s101
      %p110 = scmp.eq.s32.totalorder %s22, 0
      %p111 = por %p109, %p110
      %p112 = scmp.ne.s32.totalorder %s100, %s101
      %p113 = scmp.eq.s32.totalorder %s23, 3
      %p114 = por %p112, %p113
      %p116 = scmp.ne.s32.totalorder %s101, %s115
      %p117 = scmp.eq.s32.totalorder %s23, 0
      %p118 = por %p116, %p117
      %s120 = sadd.s32 %s119, 1
      %p123 = scmp.eq.s32.totalorder %s17, 3
      %p124 = scmp.ne.s32.totalorder %s119, %s121
      %p125 = scmp.eq.s32.totalorder %s17, 0
      %p126 = por %p124, %p125
      %p127 = scmp.ne.s32.totalorder %s119, %s121
      %p128 = scmp.eq.s32.totalorder %s22, 3
      %p129 = por %p127, %p128
      %p130 = scmp.ne.s32.totalorder %s121, %s122
      %p131 = scmp.eq.s32.totalorder %s22, 0
      %p132 = por %p130, %p131
      %p133 = scmp.ne.s32.totalorder %s121, %s122
      %p134 = scmp.eq.s32.totalorder %s23, 3
      %p135 = por %p133, %p134
      %p137 = scmp.ne.s32.totalorder %s122, %s136
      %p138 = scmp.eq.s32.totalorder %s23, 0
      %p139 = por %p137, %p138
      %s141 = sadd.s32 %s140, 1
      %p144 = scmp.eq.s32.totalorder %s17, 3
      %p145 = scmp.ne.s32.totalorder %s140, %s142
      %p146 = scmp.eq.s32.totalorder %s17, 0
      %p147 = por %p145, %p146
      %p148 = scmp.ne.s32.totalorder %s140, %s142
      %p149 = scmp.eq.s32.totalorder %s22, 3
      %p150 = por %p148, %p149
      %p151 = scmp.ne.s32.totalorder %s142, %s143
      %p152 = scmp.eq.s32.totalorder %s22, 0
      %p153 = por %p151, %p152
      %p154 = scmp.ne.s32.totalorder %s142, %s143
      %p155 = scmp.eq.s32.totalorder %s23, 3
      %p156 = por %p154, %p155
      %p158 = scmp.ne.s32.totalorder %s143, %s157
      %p159 = scmp.eq.s32.totalorder %s23, 0
      %p160 = por %p158, %p159
      %s162 = sadd.s32 %s161, 1
      %p165 = scmp.eq.s32.totalorder %s17, 3
      %p166 = scmp.ne.s32.totalorder %s161, %s163
      %p167 = scmp.eq.s32.totalorder %s17, 0
      %p168 = por %p166, %p167
      %p169 = scmp.ne.s32.totalorder %s161, %s163
      %p170 = scmp.eq.s32.totalorder %s22, 3
      %p171 = por %p169, %p170
      %p172 = scmp.ne.s32.totalorder %s163, %s164
      %p173 = scmp.eq.s32.totalorder %s22, 0
      %p174 = por %p172, %p173
      %p175 = scmp.ne.s32.totalorder %s163, %s164
      %p176 = scmp.eq.s32.totalorder %s23, 3
      %p177 = por %p175, %p176
      %p179 = scmp.ne.s32.totalorder %s164, %s178
      %p180 = scmp.eq.s32.totalorder %s23, 0
      %p181 = por %p179, %p180
      %s183 = sadd.s32 %s182, 1
      %p186 = scmp.eq.s32.totalorder %s17, 3
      %p187 = scmp.ne.s32.totalorder %s182, %s184
      %p188 = scmp.eq.s32.totalorder %s17, 0
      %p189 = por %p187, %p188
      %p190 = scmp.ne.s32.totalorder %s182, %s184
      %p191 = scmp.eq.s32.totalorder %s22, 3
      %p192 = por %p190, %p191
      %p193 = scmp.ne.s32.totalorder %s184, %s185
      %p194 = scmp.eq.s32.totalorder %s22, 0
      %p195 = por %p193, %p194
      %p196 = scmp.ne.s32.totalorder %s184, %s185
      %p197 = scmp.eq.s32.totalorder %s23, 3
      %p198 = por %p196, %p197
      %p200 = scmp.ne.s32.totalorder %s185, %s199
      %p201 = scmp.eq.s32.totalorder %s23, 0
      %p202 = por %p200, %p201
      %s203 = ssub.s32 %s17, %s24
      %p204 = scmp.eq.s32.totalorder %s203, 0
      %s206 = sadd.s32 %s205, 1
      %s207 = scalar_select %p204, %s205, %s206
      %p210 = pneg %p204
      %p211 = scmp.eq.s32.totalorder %s17, 3
      %p212 = por %p210, %p211
      %p213 = scmp.ne.s32.totalorder %s205, %s208
      %p214 = scmp.eq.s32.totalorder %s17, 0
      %p215 = por %p213, %p214
      %p216 = scmp.ne.s32.totalorder %s205, %s208
      %p217 = scmp.eq.s32.totalorder %s22, 3
      %p218 = por %p216, %p217
      %p219 = scmp.ne.s32.totalorder %s208, %s209
      %p220 = scmp.eq.s32.totalorder %s22, 0
      %p221 = por %p219, %p220
      %p222 = scmp.ne.s32.totalorder %s208, %s209
      %p223 = scmp.eq.s32.totalorder %s23, 3
      %p224 = por %p222, %p223
      %p226 = scmp.ne.s32.totalorder %s209, %s225
      %p227 = scmp.eq.s32.totalorder %s23, 0
      %p228 = por %p226, %p227
      %p229 = scmp.le.s32.totalorder 1, %s17
      %p230 = scmp.lt.s32.totalorder %s17, 5
      %p231 = pnand %p229, %p230
      %p232 = pneg %p231
      // Predicated region
      $region9: #{tpu_custom_call.1} parent=5 // pred_check
        _
      $region10: #{tpu_custom_call.1} parent=5 // pred_check_branch
        %234 = sbr.rel (%p231) target = $region12
      $region11: #{tpu_custom_call.1} parent=5 // pred_region
        %s235 = ssub.s32 %s17, 1
        // Predicated region
        $region13: #{tpu_custom_call.1} parent=11 // pred_check
          %p236 = pneg %p90
        $region14: #{tpu_custom_call.1} parent=11 // pred_check_branch
          %238 = sbr.rel (%p236) target = $region16
        $region15: #{tpu_custom_call.1} parent=11 // pred_region
          _
        $region16: #{tpu_custom_call.1} parent=11 // pred_fallthru
          _
        // Predicated region
        $region17: #{tpu_custom_call.1} parent=11 // pred_check
          %p239 = pneg %p111
        $region18: #{tpu_custom_call.1} parent=11 // pred_check_branch
          %241 = sbr.rel (%p239) target = $region20
        $region19: #{tpu_custom_call.1} parent=11 // pred_region
          _
        $region20: #{tpu_custom_call.1} parent=11 // pred_fallthru
          _
        // Predicated region
        $region21: #{tpu_custom_call.1} parent=11 // pred_check
          %p242 = pneg %p132
        $region22: #{tpu_custom_call.1} parent=11 // pred_check_branch
          %244 = sbr.rel (%p242) target = $region24
        $region23: #{tpu_custom_call.1} parent=11 // pred_region
          _
        $region24: #{tpu_custom_call.1} parent=11 // pred_fallthru
          _
        // Predicated region
        $region25: #{tpu_custom_call.1} parent=11 // pred_check
          %p245 = pneg %p153
        $region26: #{tpu_custom_call.1} parent=11 // pred_check_branch
          %247 = sbr.rel (%p245) target = $region28
        $region27: #{tpu_custom_call.1} parent=11 // pred_region
          _
        $region28: #{tpu_custom_call.1} parent=11 // pred_fallthru
          _
        // Predicated region
        $region29: #{tpu_custom_call.1} parent=11 // pred_check
          %p248 = pneg %p174
        $region30: #{tpu_custom_call.1} parent=11 // pred_check_branch
          %250 = sbr.rel (%p248) target = $region32
        $region31: #{tpu_custom_call.1} parent=11 // pred_region
          _
        $region32: #{tpu_custom_call.1} parent=11 // pred_fallthru
          _
        // Predicated region
        $region33: #{tpu_custom_call.1} parent=11 // pred_check
          %p251 = pneg %p195
        $region34: #{tpu_custom_call.1} parent=11 // pred_check_branch
          %253 = sbr.rel (%p251) target = $region36
        $region35: #{tpu_custom_call.1} parent=11 // pred_region
          _
        $region36: #{tpu_custom_call.1} parent=11 // pred_fallthru
          _
      $region12: #{tpu_custom_call.1} parent=5 // pred_fallthru
        _
      %p254 = scmp.lt.s32.totalorder %s17, 4
      // Predicated region
      $region37: #{tpu_custom_call.1} parent=5 // pred_check
        %p255 = pneg %p254
      $region38: #{tpu_custom_call.1} parent=5 // pred_check_branch
        %257 = sbr.rel (%p255) target = $region40
      $region39: #{tpu_custom_call.1} parent=5 // pred_region
        // Predicated region
        $region41: #{tpu_custom_call.1} parent=39 // pred_check
          %p258 = pneg %p37
        $region42: #{tpu_custom_call.1} parent=39 // pred_check_branch
          %260 = sbr.rel (%p258) target = $region44
        $region43: #{tpu_custom_call.1} parent=39 // pred_region
          %s261 = smul.u32 2, %s17
          %p262 = scmp.lt.s32.totalorder %s261, 7
          %s263 = scalar_select %p262, %s261, 7
          %s264 = smul.addr %s263, 8
          %s265 = scalar_lea.vmem %s0, %s264
          %s266 = smul.u32 2, %s17
        $region44: #{tpu_custom_call.1} parent=39 // pred_fallthru
          _
        // Predicated region
        $region45: #{tpu_custom_call.1} parent=39 // pred_check
          %p267 = pneg %p63
        $region46: #{tpu_custom_call.1} parent=39 // pred_check_branch
          %269 = sbr.rel (%p267) target = $region48
        $region47: #{tpu_custom_call.1} parent=39 // pred_region
          %s270 = smul.u32 2, %s17
          %p271 = scmp.lt.s32.totalorder %s270, 7
          %s272 = scalar_select %p271, %s270, 7
          %s273 = smul.addr %s272, 8
          %s274 = scalar_lea.vmem %s1, %s273
          %s275 = smul.u32 2, %s17
        $region48: #{tpu_custom_call.1} parent=39 // pred_fallthru
          _
      $region40: #{tpu_custom_call.1} parent=5 // pred_fallthru
        _
      %p276 = scmp.le.s32.totalorder 1, %s17
      %p277 = scmp.lt.s32.totalorder %s17, 5
      %p278 = pnand %p276, %p277
      %p279 = pneg %p278
      // Predicated region
      $region49: #{tpu_custom_call.1} parent=5 // pred_check
        _
      $region50: #{tpu_custom_call.1} parent=5 // pred_check_branch
        %281 = sbr.rel (%p278) target = $region52
      $region51: #{tpu_custom_call.1} parent=5 // pred_region
        %s282 = ssub.s32 %s17, 1
        %s283 = smul.u32 2, %s22
        %p284 = scmp.lt.s32.totalorder %s283, 7
        %s285 = scalar_select %p284, %s283, 7
        %s286 = smul.addr %s285, 8
        %s287 = scalar_lea.vmem %s0, %s286
        %p288 = pneg %p43
        %p289 = pneg %p40
        %s290 = smul.u32 2, %s22
        %p291 = scmp.lt.s32.totalorder %s290, 7
        %s292 = scalar_select %p291, %s290, 7
        %s293 = smul.addr %s292, 8
        %s294 = scalar_lea.vmem %s1, %s293
        %p295 = pneg %p69
        %p296 = pneg %p66
        %p297 = pneg %p90
        %p298 = pneg %p87
        %p299 = pneg %p111
        %p300 = pneg %p108
        %p301 = pneg %p132
        %p302 = pneg %p129
        %p303 = pneg %p153
        %p304 = pneg %p150
        %p305 = pneg %p174
        %p306 = pneg %p171
        %p307 = pneg %p195
        %p308 = pneg %p192
        %p309 = pneg %p221
        %p310 = pneg %p218
        %s311 = sand.u32 %s208, 1
        %s312 = scalar_lea.sflag [#allocation3], %s311
        %s313 = sand.u32 %s208, 1
        %s314 = smul.addr %s313, 16
        %s315 = scalar_lea.vmem [#allocation2], %s314
        %s316 = smul.u32 2, %s22
        %p317 = scmp.lt.s32.totalorder %s316, 7
        %s318 = scalar_select %p317, %s316, 7
        %s319 = smul.addr %s318, 8
        %s320 = scalar_lea.vmem %s0, %s319
        %s321 = smul.u32 2, %s22
        %s322 = smul.u32 2, %s22
        %p323 = scmp.lt.s32.totalorder %s322, 7
        %s324 = scalar_select %p323, %s322, 7
        %s325 = smul.addr %s324, 8
        %s326 = scalar_lea.vmem %s1, %s325
        %s327 = smul.u32 2, %s22
        %s328 = smul.u32 2, %s22
        %v330 = vld [vmem:[%s320] sm:$0xff]
        %v331 = vld [vmem:[%s320 + $0x8] sm:$0xff]
        %v332 = vpack.c.bf16 %v331, %v330
        %v333 = vld [vmem:[%s326] sm:$0xff]
        %v334 = vld [vmem:[%s326 + $0x8] sm:$0xff]
        %v335 = vpack.c.bf16 %v334, %v333
        %v336 = vld [vmem:[%s7] sm:$0xff]
        %v337 = vld [vmem:[%s7 + $0x8] sm:$0x1f]
        %v339 = vrot.slane %v336, 1
        %340 = vrot.lane.b32.xlu0 %v339, 32
        %v341 = vpop.permute.xlu0 %340
        %vm343 = vcmask 261120
        %v344 = vsel %vm343, %v336, %v341
        %v345 = vld [vmem:[%s2] sm:$0xf]
        %v346 = vld [vmem:[%s2 + $0x4] sm:$0xf]
        %v347 = vld [vmem:[%s2 + $0x8] sm:$0xf]
        %v348 = vld [vmem:[%s2 + $0xc] sm:$0xf]
        %v353 = vunpack.c.l.b16 %v345
        %v354 = vunpack.c.l.b16 %v346
        %v355 = vunpack.c.l.b16 %v347
        %v356 = vunpack.c.l.b16 %v348
        %v357 = vpack.c.b16 %v354, %v353
        %v358 = vpack.c.b16 %v356, %v355
        %v362 = vsel %vm343, %v332, 0
        %364 = vmatpush.bf16.msra.mxu0 0
        %365 = vmatpush.bf16.msra.mxu0 0
        %366 = vmatpush.bf16.msra.mxu0 0
        %367 = vmatpush.bf16.msra.mxu0 0
        %368 = vmatpush.bf16.msra.mxu0 0
        %369 = vmatpush.bf16.msra.mxu0 0
        %370 = vmatpush.bf16.msra.mxu0 %v358
        %371 = vmatpush.bf16.msra.mxu0 %v357
        %372 = vmatmul.bf16.gmra.mxu0 %v362
        %v373 = vpop.f32.mrf.mxu0
        %v374 = vadd.f32 0.0, %v373
        %v375 = vpop.f32.mrf.mxu0
        %v376 = vadd.f32 0.0, %v375
        %377 = vdwg.mxu0
        %v378 = vperm.slane %v336, 0
        %v379 = vadd.f32 %v374, %v378
        %v380 = vadd.f32 %v376, %v378
        %v381 = vmax.f32 %v379, 0.0
        %v382 = vmax.f32 %v380, 0.0
        %v383 = vpack.c.bf16 %v382, %v381
        %v384 = vld [vmem:[%s4] sm:$0xf]
        %v385 = vld [vmem:[%s4 + $0x4] sm:$0xf]
        %v386 = vld [vmem:[%s4 + $0x8] sm:$0xf]
        %v387 = vld [vmem:[%s4 + $0xc] sm:$0xf]
        %v388 = vperm.slane %v336, 1
        %v393 = vunpack.c.l.b16 %v384
        %v394 = vunpack.c.l.b16 %v385
        %v395 = vunpack.c.l.b16 %v386
        %v396 = vunpack.c.l.b16 %v387
        %v397 = vpack.c.b16 %v394, %v393
        %v398 = vpack.c.b16 %v396, %v395
        %v402 = vsel %vm343, %v383, 0
        %404 = vmatpush.bf16.msra.mxu0 0
        %405 = vmatpush.bf16.msra.mxu0 0
        %406 = vmatpush.bf16.msra.mxu0 0
        %407 = vmatpush.bf16.msra.mxu0 0
        %408 = vmatpush.bf16.msra.mxu0 0
        %409 = vmatpush.bf16.msra.mxu0 0
        %410 = vmatpush.bf16.msra.mxu0 %v398
        %411 = vmatpush.bf16.msra.mxu0 %v397
        %412 = vmatmul.bf16.gmra.mxu0 %v402
        %v413 = vpop.f32.mrf.mxu0
        %v414 = vadd.f32 %v388, %v413
        %v415 = vpop.f32.mrf.mxu0
        %v416 = vadd.f32 %v388, %v415
        %417 = vdwg.mxu0
        %v418 = vld [vmem:[%s3] sm:$0xf]
        %v419 = vld [vmem:[%s3 + $0x4] sm:$0xf]
        %v420 = vld [vmem:[%s3 + $0x8] sm:$0xf]
        %v421 = vld [vmem:[%s3 + $0xc] sm:$0xf]
        %v426 = vunpack.c.l.b16 %v418
        %v427 = vunpack.c.l.b16 %v419
        %v428 = vunpack.c.l.b16 %v420
        %v429 = vunpack.c.l.b16 %v421
        %v430 = vpack.c.b16 %v427, %v426
        %v431 = vpack.c.b16 %v429, %v428
        %v435 = vsel %vm343, %v335, 0
        %437 = vmatpush.bf16.msra.mxu0 0
        %438 = vmatpush.bf16.msra.mxu0 0
        %439 = vmatpush.bf16.msra.mxu0 0
        %440 = vmatpush.bf16.msra.mxu0 0
        %441 = vmatpush.bf16.msra.mxu0 0
        %442 = vmatpush.bf16.msra.mxu0 0
        %443 = vmatpush.bf16.msra.mxu0 %v431
        %444 = vmatpush.bf16.msra.mxu0 %v430
        %445 = vmatmul.bf16.gmra.mxu0 %v435
        %v446 = vpop.f32.mrf.mxu0
        %v447 = vadd.f32 0.0, %v446
        %v448 = vpop.f32.mrf.mxu0
        %v449 = vadd.f32 0.0, %v448
        %450 = vdwg.mxu0
        %453 = vrot.lane.b32.xlu0 %v447, 32
        %v454 = vpop.permute.xlu0 %453
        %455 = vrot.lane.b32.xlu0 %v449, 32
        %v456 = vpop.permute.xlu0 %455
        %v459 = vadd.f32 %v374, %v454
        %v460 = vadd.f32 %v376, %v456
        %v461 = vperm.slane %v336, 2
        %463 = vrot.lane.b32.xlu0 %v461, 32
        %v464 = vpop.permute.xlu0 %463
        %v466 = vadd.f32 %v459, %v464
        %v467 = vadd.f32 %v460, %v464
        %v468 = vmax.f32 %v466, 0.0
        %v469 = vmax.f32 %v467, 0.0
        %v470 = vpack.c.bf16 %v469, %v468
        %s471 = scalar_lea.vmem %s3, 16
        %v472 = vld [vmem:[%s471] sm:$0xf]
        %v473 = vld [vmem:[%s471 + $0x4] sm:$0xf]
        %v474 = vld [vmem:[%s471 + $0x8] sm:$0xf]
        %v475 = vld [vmem:[%s471 + $0xc] sm:$0xf]
        %v476 = vperm.slane %v336, 3
        %478 = vrot.lane.b32.xlu0 %v470, 96
        %v479 = vpop.permute.xlu0 %478
        %v484 = vunpack.c.l.b16 %v472
        %v485 = vunpack.c.l.b16 %v473
        %v486 = vunpack.c.l.b16 %v474
        %v487 = vunpack.c.l.b16 %v475
        %v488 = vpack.c.b16 %v485, %v484
        %v489 = vpack.c.b16 %v487, %v486
        %v493 = vsel %vm343, %v479, 0
        %495 = vmatpush.bf16.msra.mxu0 0
        %496 = vmatpush.bf16.msra.mxu0 0
        %497 = vmatpush.bf16.msra.mxu0 0
        %498 = vmatpush.bf16.msra.mxu0 0
        %499 = vmatpush.bf16.msra.mxu0 0
        %500 = vmatpush.bf16.msra.mxu0 0
        %501 = vmatpush.bf16.msra.mxu0 %v489
        %502 = vmatpush.bf16.msra.mxu0 %v488
        %503 = vmatmul.bf16.gmra.mxu0 %v493
        %v504 = vpop.f32.mrf.mxu0
        %v505 = vadd.f32 %v476, %v504
        %v506 = vpop.f32.mrf.mxu0
        %v507 = vadd.f32 %v476, %v506
        %508 = vdwg.mxu0
        %v509 = vperm.slane %v336, 4
        %511 = vrot.lane.b32.xlu0 %v509, 64
        %v512 = vpop.permute.xlu0 %511
        %v514 = vadd.f32 %v374, %v512
        %v515 = vadd.f32 %v376, %v512
        %v516 = vpack.c.bf16 %v515, %v514
        %s517 = scalar_lea.vmem %s3, 32
        %v518 = vld [vmem:[%s517] sm:$0xf]
        %v519 = vld [vmem:[%s517 + $0x4] sm:$0xf]
        %v520 = vld [vmem:[%s517 + $0x8] sm:$0xf]
        %v521 = vld [vmem:[%s517 + $0xc] sm:$0xf]
        %v522 = vperm.slane %v336, 5
        %524 = vrot.lane.b32.xlu0 %v516, 64
        %v525 = vpop.permute.xlu0 %524
        %v530 = vunpack.c.l.b16 %v518
        %v531 = vunpack.c.l.b16 %v519
        %v532 = vunpack.c.l.b16 %v520
        %v533 = vunpack.c.l.b16 %v521
        %v534 = vpack.c.b16 %v531, %v530
        %v535 = vpack.c.b16 %v533, %v532
        %v539 = vsel %vm343, %v525, 0
        %541 = vmatpush.bf16.msra.mxu0 0
        %542 = vmatpush.bf16.msra.mxu0 0
        %543 = vmatpush.bf16.msra.mxu0 0
        %544 = vmatpush.bf16.msra.mxu0 0
        %545 = vmatpush.bf16.msra.mxu0 0
        %546 = vmatpush.bf16.msra.mxu0 0
        %547 = vmatpush.bf16.msra.mxu0 %v535
        %548 = vmatpush.bf16.msra.mxu0 %v534
        %549 = vmatmul.bf16.gmra.mxu0 %v539
        %v550 = vpop.f32.mrf.mxu0
        %v551 = vadd.f32 %v522, %v550
        %v552 = vpop.f32.mrf.mxu0
        %v553 = vadd.f32 %v522, %v552
        %554 = vdwg.mxu0
        %v555 = vadd.f32 %v330, %v551
        %v556 = vadd.f32 %v331, %v553
        %v557 = vsel %vm343, %v555, 0.0
        %558 = vadd.xlane.f32.xlu0 %v557
        %v559 = vpop.xlane.xlu0 %558
        %v560 = vsel %vm343, %v556, 0.0
        %561 = vadd.xlane.f32.xlu0 %v560
        %v562 = vpop.xlane.xlu0 %561
        %v563 = vrcp.pop 32.0
        %v564 = vmul.f32 32.0, %v563
        %v565 = vsub.f32 1.0, %v564
        %v566 = vmul.f32 %v563, %v565
        %v567 = vadd.f32 %v563, %v566
        %vm568 = vweird.f32 %v563
        %v569 = vsel %vm568, %v563, %v567
        %v570 = vmul.f32 %v559, %v569
        %v571 = vmul.f32 %v562, %v569
        %v572 = vmul.f32 %v555, %v555
        %v573 = vmul.f32 %v556, %v556
        %v574 = vsel %vm343, %v572, 0.0
        %575 = vadd.xlane.f32.xlu0 %v574
        %v576 = vpop.xlane.xlu0 %575
        %v577 = vsel %vm343, %v573, 0.0
        %578 = vadd.xlane.f32.xlu0 %v577
        %v579 = vpop.xlane.xlu0 %578
        %v580 = vmul.f32 %v576, %v569
        %v581 = vmul.f32 %v579, %v569
        %v582 = vmul.f32 %v570, %v570
        %v583 = vmul.f32 %v571, %v571
        %v584 = vsub.f32 %v580, %v582
        %v585 = vsub.f32 %v581, %v583
        %v586 = vsub.f32 %v555, %v570
        %v587 = vsub.f32 %v556, %v571
        %v588 = vadd.f32 %v584, 1e-05
        %v589 = vadd.f32 %v585, 1e-05
        %v590 = vrsqrt.pop %v588
        %v591 = vmul.f32 %v590, %v588
        %v592 = vmul.f32 %v591, %v590
        %v593 = vmul.f32 0.5, %v592
        %v594 = vsub.f32 1.5, %v593
        %v595 = vmul.f32 %v590, %v594
        %vm596 = vweird.f32 %v588
        %vm597 = vweird.f32 %v590
        %vm598 = vmor %vm596, %vm597
        %v599 = vsel %vm598, %v590, %v595
        %v600 = vrsqrt.pop %v589
        %v601 = vmul.f32 %v600, %v589
        %v602 = vmul.f32 %v601, %v600
        %v603 = vmul.f32 0.5, %v602
        %v604 = vsub.f32 1.5, %v603
        %v605 = vmul.f32 %v600, %v604
        %vm606 = vweird.f32 %v589
        %vm607 = vweird.f32 %v600
        %vm608 = vmor %vm606, %vm607
        %v609 = vsel %vm608, %v600, %v605
        %v610 = vmul.f32 %v586, %v599
        %v611 = vmul.f32 %v587, %v609
        %v612 = vperm.slane %v337, 1
        %v613 = vmul.f32 %v610, %v612
        %v614 = vmul.f32 %v611, %v612
        %v615 = vperm.slane %v337, 2
        %v616 = vadd.f32 %v613, %v615
        %v617 = vadd.f32 %v614, %v615
        %v618 = vpack.c.bf16 %v617, %v616
        %v619 = vld [vmem:[%s5] sm:$0xf]
        %v620 = vld [vmem:[%s5 + $0x4] sm:$0xf]
        %v621 = vld [vmem:[%s5 + $0x8] sm:$0xf]
        %v622 = vld [vmem:[%s5 + $0xc] sm:$0xf]
        %v623 = vperm.slane %v344, 6
        %v628 = vunpack.c.l.b16 %v619
        %v629 = vunpack.c.l.b16 %v620
        %v630 = vunpack.c.l.b16 %v621
        %v631 = vunpack.c.l.b16 %v622
        %v632 = vpack.c.b16 %v629, %v628
        %v633 = vpack.c.b16 %v631, %v630
        %v637 = vsel %vm343, %v618, 0
        %639 = vmatpush.bf16.msra.mxu0 0
        %640 = vmatpush.bf16.msra.mxu0 0
        %641 = vmatpush.bf16.msra.mxu0 0
        %642 = vmatpush.bf16.msra.mxu0 0
        %643 = vmatpush.bf16.msra.mxu0 0
        %644 = vmatpush.bf16.msra.mxu0 0
        %645 = vmatpush.bf16.msra.mxu0 %v633
        %646 = vmatpush.bf16.msra.mxu0 %v632
        %647 = vmatmul.bf16.gmra.mxu0 %v637
        %v648 = vpop.f32.mrf.mxu0
        %v649 = vadd.f32 %v623, %v648
        %v650 = vpop.f32.mrf.mxu0
        %v651 = vadd.f32 %v623, %v650
        %652 = vdwg.mxu0
        %v653 = vmax.f32 %v649, 0.0
        %v654 = vmax.f32 %v651, 0.0
        %v655 = vpack.c.bf16 %v654, %v653
        %v656 = vld [vmem:[%s6] sm:$0xf]
        %v657 = vld [vmem:[%s6 + $0x4] sm:$0xf]
        %v658 = vld [vmem:[%s6 + $0x8] sm:$0xf]
        %v659 = vld [vmem:[%s6 + $0xc] sm:$0xf]
        %v660 = vld [vmem:[%s6 + $0x10] sm:$0xf]
        %v661 = vld [vmem:[%s6 + $0x14] sm:$0xf]
        %v662 = vld [vmem:[%s6 + $0x18] sm:$0xf]
        %v663 = vld [vmem:[%s6 + $0x1c] sm:$0xf]
        %v664 = vperm.slane %v337, 0
        %v673 = vunpack.c.l.b16 %v656
        %v674 = vunpack.c.l.b16 %v657
        %v675 = vunpack.c.l.b16 %v658
        %v676 = vunpack.c.l.b16 %v659
        %v677 = vunpack.c.l.b16 %v660
        %v678 = vunpack.c.l.b16 %v661
        %v679 = vunpack.c.l.b16 %v662
        %v680 = vunpack.c.l.b16 %v663
        %v681 = vpack.c.b16 %v674, %v673
        %v682 = vpack.c.b16 %v676, %v675
        %v683 = vpack.c.b16 %v678, %v677
        %v684 = vpack.c.b16 %v680, %v679
        %vm689 = vcmask 523264
        %v691 = vsel %vm689, %v655, 0
        %693 = vmatpush.bf16.msra.mxu0 0
        %694 = vmatpush.bf16.msra.mxu0 0
        %695 = vmatpush.bf16.msra.mxu0 0
        %696 = vmatpush.bf16.msra.mxu0 0
        %697 = vmatpush.bf16.msra.mxu0 %v684
        %698 = vmatpush.bf16.msra.mxu0 %v683
        %699 = vmatpush.bf16.msra.mxu0 %v682
        %700 = vmatpush.bf16.msra.mxu0 %v681
        %701 = vmatmul.bf16.gmra.mxu0 %v691
        %v702 = vpop.f32.mrf.mxu0
        %v703 = vadd.f32 %v664, %v702
        %v704 = vpop.f32.mrf.mxu0
        %v705 = vadd.f32 %v664, %v704
        %706 = vdwg.mxu0
        %v707 = vadd.f32 %v616, %v703
        %v708 = vadd.f32 %v617, %v705
        %v709 = vsel %vm343, %v707, 0.0
        %710 = vadd.xlane.f32.xlu0 %v709
        %v711 = vpop.xlane.xlu0 %710
        %v712 = vsel %vm343, %v708, 0.0
        %713 = vadd.xlane.f32.xlu0 %v712
        %v714 = vpop.xlane.xlu0 %713
        %v715 = vmul.f32 %v711, %v569
        %v716 = vmul.f32 %v714, %v569
        %v717 = vmul.f32 %v707, %v707
        %v718 = vmul.f32 %v708, %v708
        %v719 = vsel %vm343, %v717, 0.0
        %720 = vadd.xlane.f32.xlu0 %v719
        %v721 = vpop.xlane.xlu0 %720
        %v722 = vsel %vm343, %v718, 0.0
        %723 = vadd.xlane.f32.xlu0 %v722
        %v724 = vpop.xlane.xlu0 %723
        %v725 = vmul.f32 %v721, %v569
        %v726 = vmul.f32 %v724, %v569
        %v727 = vmul.f32 %v715, %v715
        %v728 = vmul.f32 %v716, %v716
        %v729 = vsub.f32 %v725, %v727
        %v730 = vsub.f32 %v726, %v728
        %v731 = vsub.f32 %v707, %v715
        %v732 = vsub.f32 %v708, %v716
        %v733 = vadd.f32 %v729, 1e-05
        %v734 = vadd.f32 %v730, 1e-05
        %v735 = vrsqrt.pop %v733
        %v736 = vmul.f32 %v735, %v733
        %v737 = vmul.f32 %v736, %v735
        %v738 = vmul.f32 0.5, %v737
        %v739 = vsub.f32 1.5, %v738
        %v740 = vmul.f32 %v735, %v739
        %vm741 = vweird.f32 %v733
        %vm742 = vweird.f32 %v735
        %vm743 = vmor %vm741, %vm742
        %v744 = vsel %vm743, %v735, %v740
        %v745 = vrsqrt.pop %v734
        %v746 = vmul.f32 %v745, %v734
        %v747 = vmul.f32 %v746, %v745
        %v748 = vmul.f32 0.5, %v747
        %v749 = vsub.f32 1.5, %v748
        %v750 = vmul.f32 %v745, %v749
        %vm751 = vweird.f32 %v734
        %vm752 = vweird.f32 %v745
        %vm753 = vmor %vm751, %vm752
        %v754 = vsel %vm753, %v745, %v750
        %v755 = vmul.f32 %v731, %v744
        %v756 = vmul.f32 %v732, %v754
        %v757 = vperm.slane %v337, 3
        %v758 = vmul.f32 %v755, %v757
        %v759 = vmul.f32 %v756, %v757
        %v760 = vperm.slane %v337, 4
        %v761 = vadd.f32 %v758, %v760
        %v762 = vadd.f32 %v759, %v760
        %vm763 = vcmask 130048
        %764 = vst.msk [vmem:[%s315] sm:$0xff] %vm763, %v414
        %765 = vst.msk [vmem:[%s315 + $0x8] sm:$0xff] %vm763, %v416
        %768 = vrot.lane.b32.xlu0 %v505, 16
        %v769 = vpop.permute.xlu0 %768
        %770 = vrot.lane.b32.xlu0 %v507, 16
        %v771 = vpop.permute.xlu0 %770
        %vm774 = vcmask 392320
        %775 = vst.msk [vmem:[%s315] sm:$0xff] %vm774, %v769
        %776 = vst.msk [vmem:[%s315 + $0x8] sm:$0xff] %vm774, %v771
        %779 = vrot.lane.b32.xlu0 %v761, 48
        %v780 = vpop.permute.xlu0 %779
        %781 = vrot.lane.b32.xlu0 %v762, 48
        %v782 = vpop.permute.xlu0 %781
        %vm785 = vcmask 654720
        %786 = vst.msk [vmem:[%s315] sm:$0xff] %vm785, %v780
        %787 = vst.msk [vmem:[%s315 + $0x8] sm:$0xff] %vm785, %v782
        %s788 = sand.u32 %s208, 1
        %s789 = scalar_lea.sflag [#allocation3], %s788
        %s790 = sand.u32 %s208, 1
        %s791 = smul.addr %s790, 16
        %s792 = scalar_lea.vmem [#allocation2], %s791
        // Predicated region
        $region53: #{tpu_custom_call.1} parent=51 // pred_check
          %p793 = pneg %p218
        $region54: #{tpu_custom_call.1} parent=51 // pred_check_branch
          %795 = sbr.rel (%p793) target = $region56
        $region55: #{tpu_custom_call.1} parent=51 // pred_region
          %s796 = smul.u32 2, %s22
          %798 = vsyncadd %s789, 0
          %s799 = smul.addr %s796, 8
          %s800 = scalar_lea.hbm %s8, %s799
          %s801 = sshll.u32 %s792, 4
          %s802 = int_to_ptr.vmem [resolvable:$true] %s801
          %s803 = sshll.u32 %s800, 4
          %s804 = int_to_ptr.hbm [resolvable:$true] %s803
          %809 = dma.vmem_to_hbm [thread:$0]  %s802, 256, %s804, %s789, 128, 128, 8
        $region56: #{tpu_custom_call.1} parent=51 // pred_fallthru
          _
      $region52: #{tpu_custom_call.1} parent=5 // pred_fallthru
        _
      %p810 = scmp.le.s32.totalorder 2, %s17
      // Predicated region
      $region57: #{tpu_custom_call.1} parent=5 // pred_check
        %p811 = pneg %p810
      $region58: #{tpu_custom_call.1} parent=5 // pred_check_branch
        %813 = sbr.rel (%p811) target = $region60
      $region59: #{tpu_custom_call.1} parent=5 // pred_region
        %s814 = ssub.s32 %s17, 2
        // Predicated region
        $region61: #{tpu_custom_call.1} parent=59 // pred_check
          %p815 = pneg %p224
        $region62: #{tpu_custom_call.1} parent=59 // pred_check_branch
          %817 = sbr.rel (%p815) target = $region64
        $region63: #{tpu_custom_call.1} parent=59 // pred_region
          %s818 = sand.u32 %s209, 1
          %s819 = scalar_lea.sflag [#allocation3], %s818
          %s820 = sand.u32 %s209, 1
          %s821 = smul.addr %s820, 16
          %s822 = scalar_lea.vmem [#allocation2], %s821
          %824 = dma.done %s819, 256
        $region64: #{tpu_custom_call.1} parent=59 // pred_fallthru
          _
      $region60: #{tpu_custom_call.1} parent=5 // pred_fallthru
        _
    $region6: #{tpu_custom_call.1} parent=1 // loop_footer
      %s21 = sadd.s32 1, %s17
    $region7: #{tpu_custom_call.1} parent=1 // loop_footer_branch
      %16 = sbr.rel target = $region3
    $region8: #{tpu_custom_call.1} parent=1 // loop_exit
      _
    %825 = vsyncpa [#allocation3], 1
    %s826 = scalar_lea.sflag [#allocation3], 1
    %827 = vsyncpa %s826, 1

</llo_original>
